<compile_context>
chip_gen: v7x
topology: tpu7x:2x2x1
jax: 0.10.0
libtpu: 0.0.40
codegen_flags: <defaults>
</compile_context>

<pallas_src>
import jax
import jax.numpy as jnp
from jax.experimental import pallas as pl
from jax.experimental.pallas import tpu as pltpu  # noqa: F401  (TPU backend)


def gcn_kernel(adj_ref, x_ref, w1_ref, w2_ref, o_ref):
    # adj_ref: (B, N, N), x_ref: (B, N, D), w*_ref: (D, D) as nn.Linear (out, in),
    # o_ref: (B, N, D).  Entire problem resident in VMEM; single grid step.
    adj = adj_ref[...]
    h = x_ref[...].astype(jnp.float32)

    # Static unroll over the two GCN layers.
    for w_ref in (w1_ref, w2_ref):
        w = w_ref[...]
        # Linear (no bias): x @ W^T  -- contract feature dim of x with the
        # "in" dim of W directly; no transpose inside the kernel.
        t = jnp.einsum("bnd,ed->bne", h, w,
                       preferred_element_type=jnp.float32)        # (B, N, D)
        # bmm(adj, t): batched over B, contracting the node dimension.
        h = jnp.einsum("bnm,bmd->bnd", adj, t,
                       preferred_element_type=jnp.float32)        # (B, N, D)
        # leaky_relu with slope 0.1 (< 1, so max form is exact).
        h = jnp.maximum(h, 0.1 * h)

    o_ref[...] = h.astype(o_ref.dtype)


def gcn_forward(roi_feat, adj_matrix, w1, w2):
    """roi_feat: (B, N, D) f32, adj_matrix: (B, N, N) f32, w1/w2: (D, D) f32."""
    B, N, D = roi_feat.shape
    return pl.pallas_call(
        gcn_kernel,
        out_shape=jax.ShapeDtypeStruct((B, N, D), roi_feat.dtype),
        # grid=() (single invocation): every operand is a full-array VMEM block.
        in_specs=[
            pl.BlockSpec((B, N, N), lambda: (0, 0, 0)),   # adj
            pl.BlockSpec((B, N, D), lambda: (0, 0, 0)),   # x
            pl.BlockSpec((D, D),    lambda: (0, 0)),      # W1
            pl.BlockSpec((D, D),    lambda: (0, 0)),      # W2
        ],
        out_specs=pl.BlockSpec((B, N, D), lambda: (0, 0, 0)),
    )(adj_matrix, roi_feat, w1, w2)


def gcn_reference(roi_feat, adj_matrix, w1, w2):
    x = roi_feat
    for w in (w1, w2):
        t = jnp.einsum("bnd,ed->bne", x, w)        # x @ W^T  (Linear, no bias)
        x = jnp.einsum("bnm,bmd->bnd", adj_matrix, t)
        x = jnp.where(x > 0, x, 0.1 * x)
    return x


if __name__ == "__main__":
    # Shapes implied by the module: nz_feat = D, max_nodes = N.
    B, N, D = 2, 8, 32

    key = jax.random.PRNGKey(0)
    k_x, k_adj, k_w1, k_w2 = jax.random.split(key, 4)

    roi_feat = jax.random.normal(k_x, (B, N, D), dtype=jnp.float32)
    adj_matrix = jax.random.uniform(k_adj, (B, N, N), dtype=jnp.float32)

    # Deterministic nn.Linear-style init (uniform(-1/sqrt(D), 1/sqrt(D)), no bias).
    bound = 1.0 / jnp.sqrt(jnp.float32(D))
    w1 = jax.random.uniform(k_w1, (D, D), minval=-bound, maxval=bound,
                            dtype=jnp.float32)
    w2 = jax.random.uniform(k_w2, (D, D), minval=-bound, maxval=bound,
                            dtype=jnp.float32)

    out = gcn_forward(roi_feat, adj_matrix, w1, w2)
    out = jax.block_until_ready(out)

    ref = gcn_reference(roi_feat, adj_matrix, w1, w2)
    assert out.shape == (B, N, D)
    assert jnp.allclose(out, ref, atol=1e-5, rtol=1e-5), "mismatch vs reference"

    print("KERNEL_OK")
</pallas_src>

<mosaic_0001>
module attributes {stable_mosaic.version = 11 : i64} {
  func.func @gcn_kernel(%arg0: memref<2x8x8xf32, #tpu.memory_space<vmem>>, %arg1: memref<2x8x32xf32, #tpu.memory_space<vmem>>, %arg2: memref<32x32xf32, #tpu.memory_space<vmem>>, %arg3: memref<32x32xf32, #tpu.memory_space<vmem>>, %arg4: memref<2x8x32xf32, #tpu.memory_space<vmem>>) attributes {dimension_semantics = [], scalar_prefetch = 0 : i64, scratch_operands = 0 : i64, tpu.core_type = #tpu.core_type<tc>} {
    %c0 = arith.constant 0 : index
    %c0_0 = arith.constant 0 : index
    %c0_1 = arith.constant 0 : index
    %0 = vector.load %arg0[%c0, %c0_0, %c0_1] : memref<2x8x8xf32, #tpu.memory_space<vmem>>, vector<2x8x8xf32>
    %c0_2 = arith.constant 0 : index
    %c0_3 = arith.constant 0 : index
    %c0_4 = arith.constant 0 : index
    %1 = vector.load %arg1[%c0_2, %c0_3, %c0_4] : memref<2x8x32xf32, #tpu.memory_space<vmem>>, vector<2x8x32xf32>
    %c0_5 = arith.constant 0 : index
    %c0_6 = arith.constant 0 : index
    %2 = vector.load %arg2[%c0_5, %c0_6] : memref<32x32xf32, #tpu.memory_space<vmem>>, vector<32x32xf32>
    "tpu.trace_start"() <{level = 10 : i32, message = "bnd,ed->bne"}> : () -> ()
    %cst = arith.constant dense<0.000000e+00> : vector<2x8x32xf32>
    %3 = tpu.matmul %1, %2, %cst {dimension_numbers = #tpu.dot_dimension_numbers<[2], [1], [0, 1], [0], [0, 0, 0, 1, 1, 0], [], []>} : vector<2x8x32xf32>, vector<32x32xf32>, vector<2x8x32xf32> -> vector<2x8x32xf32>
    "tpu.trace_stop"() : () -> ()
    "tpu.trace_start"() <{level = 10 : i32, message = "bnm,bmd->bnd"}> : () -> ()
    %cst_7 = arith.constant dense<0.000000e+00> : vector<2x8x32xf32>
    %4 = tpu.matmul %0, %3, %cst_7 {dimension_numbers = #tpu.dot_dimension_numbers<[2], [1], [1], [2], [0, 0, 0, 1, 1, 2], [0], [0]>} : vector<2x8x8xf32>, vector<2x8x32xf32>, vector<2x8x32xf32> -> vector<2x8x32xf32>
    "tpu.trace_stop"() : () -> ()
    %cst_8 = arith.constant 1.000000e-01 : f32
    %5 = vector.broadcast %cst_8 : f32 to vector<2x8x32xf32>
    %6 = arith.mulf %5, %4 : vector<2x8x32xf32>
    %7 = arith.maximumf %4, %6 : vector<2x8x32xf32>
    %c0_9 = arith.constant 0 : index
    %c0_10 = arith.constant 0 : index
    %8 = vector.load %arg3[%c0_9, %c0_10] : memref<32x32xf32, #tpu.memory_space<vmem>>, vector<32x32xf32>
    "tpu.trace_start"() <{level = 10 : i32, message = "bnd,ed->bne"}> : () -> ()
    %cst_11 = arith.constant dense<0.000000e+00> : vector<2x8x32xf32>
    %9 = tpu.matmul %7, %8, %cst_11 {dimension_numbers = #tpu.dot_dimension_numbers<[2], [1], [0, 1], [0], [0, 0, 0, 1, 1, 0], [], []>} : vector<2x8x32xf32>, vector<32x32xf32>, vector<2x8x32xf32> -> vector<2x8x32xf32>
    "tpu.trace_stop"() : () -> ()
    "tpu.trace_start"() <{level = 10 : i32, message = "bnm,bmd->bnd"}> : () -> ()
    %cst_12 = arith.constant dense<0.000000e+00> : vector<2x8x32xf32>
    %10 = tpu.matmul %0, %9, %cst_12 {dimension_numbers = #tpu.dot_dimension_numbers<[2], [1], [1], [2], [0, 0, 0, 1, 1, 2], [0], [0]>} : vector<2x8x8xf32>, vector<2x8x32xf32>, vector<2x8x32xf32> -> vector<2x8x32xf32>
    "tpu.trace_stop"() : () -> ()
    %cst_13 = arith.constant 1.000000e-01 : f32
    %11 = vector.broadcast %cst_13 : f32 to vector<2x8x32xf32>
    %12 = arith.mulf %11, %10 : vector<2x8x32xf32>
    %13 = arith.maximumf %10, %12 : vector<2x8x32xf32>
    %c0_14 = arith.constant 0 : index
    %c0_15 = arith.constant 0 : index
    %c0_16 = arith.constant 0 : index
    %14 = vector.load %arg4[%c0_14, %c0_15, %c0_16] : memref<2x8x32xf32, #tpu.memory_space<vmem>>, vector<2x8x32xf32>
    tpu.vector_store %arg4[%c0_14, %c0_15, %c0_16], %13 {strides = array<i32>} : memref<2x8x32xf32, #tpu.memory_space<vmem>>, vector<2x8x32xf32>,
    return
  }
}

</mosaic_0001>

<llo_original>
// kernel: tpu_custom_call.1
$region0: #{tpu_custom_call.1}
  #allocation0 [shape = 'u32[]', space=smem, size = 0x4, offset = 0x4, fixed_abs, tag = 'smem constant byte address 0x4 - core index']
  #allocation1 [shape = 'u32[144,128]{1,0:T(1,128)}', space=vmem, size = 0x12000, scoped, tag = 'internal scratch']
  %s0 = inlined_call_operand.hbm [shape: f32[2,8,8], index: 0, kind: input, shape index: {}]
  %s1 = inlined_call_operand.hbm [shape: f32[2,8,32], index: 1, kind: input, shape index: {}]
  %s2 = inlined_call_operand.hbm [shape: f32[32,32], index: 2, kind: input, shape index: {}]
  %s3 = inlined_call_operand.hbm [shape: f32[32,32], index: 3, kind: input, shape index: {}]
  %s4 = inlined_call_operand.hbm [shape: f32[2,8,32], index: 4, kind: output, shape index: {}]
  %s5 = sld [smem:[#allocation0]]
  $region42: #{tpu_custom_call.1} parent=0
    _
  %s7 = ssub.s32 1, %s5
  %s8 = scalar_select 0, %s7, %s5
  $region1: #{tpu_custom_call.1} parent=0
    #allocation2 [shape = 'u8[8192]{0}', space=vmem, size = 0x2000, scoped, tag = 'input window, operand 0, single buffered']
    #allocation3 [shape = 's32[1]{0}', space=sflag, size = 0x4, scoped, tag = 'scoped memory for tpu_custom_call.1']
    #allocation4 [shape = 's32[1]{0}', space=sflag, size = 0x4, scoped, tag = 'scoped memory for tpu_custom_call.1']
    #allocation5 [shape = 'u8[8192]{0}', space=vmem, size = 0x2000, scoped, tag = 'input window, operand 1, single buffered']
    #allocation6 [shape = 's32[1]{0}', space=sflag, size = 0x4, scoped, tag = 'scoped memory for tpu_custom_call.1']
    #allocation7 [shape = 'u8[16384]{0}', space=vmem, size = 0x4000, scoped, tag = 'input window, operand 2, single buffered']
    #allocation8 [shape = 'u8[16384]{0}', space=vmem, size = 0x4000, scoped, tag = 'input window, operand 3, single buffered']
    #allocation9 [shape = 's32[1]{0}', space=sflag, size = 0x4, scoped, tag = 'scoped memory for tpu_custom_call.1']
    #allocation10 [shape = 'u8[8192]{0}', space=vmem, size = 0x2000, scoped, tag = 'output window, operand 0, single buffered']
    %9 = vsyncpa [#allocation3], 0
    %10 = vsyncpa [#allocation6], 0
    %11 = vsyncpa [#allocation9], 0
    %12 = vsyncpa [#allocation4], 0
    // Predicated region
    $region2: #{tpu_custom_call.1} parent=1 // pred_check
      _
    $region3: #{tpu_custom_call.1} parent=1 // pred_check_branch
      %14 = sbr.rel (0) target = $region5
    $region4: #{tpu_custom_call.1} parent=1 // pred_region
      %s16 = ssub.s32 256, 256
      %17 = vsyncadd [#allocation3], %s16
      %s18 = sshll.u32 [#allocation2], 4
      %s19 = int_to_ptr.vmem [resolvable:$true] %s18
      %24 = dma.hbm_to_vmem [thread:$0]  %s0, 256, %s19, [#allocation3], 128, 128, 8
    $region5: #{tpu_custom_call.1} parent=1 // pred_fallthru
      _
    // Predicated region
    $region6: #{tpu_custom_call.1} parent=1 // pred_check
      _
    $region7: #{tpu_custom_call.1} parent=1 // pred_check_branch
      %26 = sbr.rel (0) target = $region9
    $region8: #{tpu_custom_call.1} parent=1 // pred_region
      %s28 = ssub.s32 256, 256
      %29 = vsyncadd [#allocation6], %s28
      %s30 = sshll.u32 [#allocation5], 4
      %s31 = int_to_ptr.vmem [resolvable:$true] %s30
      %36 = dma.hbm_to_vmem [thread:$0]  %s1, 256, %s31, [#allocation6], 128, 128, 8
    $region9: #{tpu_custom_call.1} parent=1 // pred_fallthru
      _
    // Predicated region
    $region10: #{tpu_custom_call.1} parent=1 // pred_check
      _
    $region11: #{tpu_custom_call.1} parent=1 // pred_check_branch
      %38 = sbr.rel (0) target = $region13
    $region12: #{tpu_custom_call.1} parent=1 // pred_region
      %s40 = ssub.s32 512, 512
      %41 = vsyncadd [#allocation6], %s40
      %s42 = sshll.u32 [#allocation7], 4
      %s43 = int_to_ptr.vmem [resolvable:$true] %s42
      %48 = dma.hbm_to_vmem [thread:$0]  %s2, 512, %s43, [#allocation6], 128, 128, 8
    $region13: #{tpu_custom_call.1} parent=1 // pred_fallthru
      _
    // Predicated region
    $region14: #{tpu_custom_call.1} parent=1 // pred_check
      _
    $region15: #{tpu_custom_call.1} parent=1 // pred_check_branch
      %50 = sbr.rel (0) target = $region17
    $region16: #{tpu_custom_call.1} parent=1 // pred_region
      %s52 = ssub.s32 512, 512
      %53 = vsyncadd [#allocation9], %s52
      %s54 = sshll.u32 [#allocation8], 4
      %s55 = int_to_ptr.vmem [resolvable:$true] %s54
      %60 = dma.hbm_to_vmem [thread:$0]  %s3, 512, %s55, [#allocation9], 128, 128, 8
    $region17: #{tpu_custom_call.1} parent=1 // pred_fallthru
      _
    // Predicated region
    $region18: #{tpu_custom_call.1} parent=1 // pred_check
      _
    $region19: #{tpu_custom_call.1} parent=1 // pred_check_branch
      %62 = sbr.rel (0) target = $region21
    $region20: #{tpu_custom_call.1} parent=1 // pred_region
      %63 = dma.done [#allocation3], 256
    $region21: #{tpu_custom_call.1} parent=1 // pred_fallthru
      _
    // Predicated region
    $region22: #{tpu_custom_call.1} parent=1 // pred_check
      _
    $region23: #{tpu_custom_call.1} parent=1 // pred_check_branch
      %65 = sbr.rel (0) target = $region25
    $region24: #{tpu_custom_call.1} parent=1 // pred_region
      %66 = dma.done [#allocation6], 256
    $region25: #{tpu_custom_call.1} parent=1 // pred_fallthru
      _
    // Predicated region
    $region26: #{tpu_custom_call.1} parent=1 // pred_check
      _
    $region27: #{tpu_custom_call.1} parent=1 // pred_check_branch
      %68 = sbr.rel (0) target = $region29
    $region28: #{tpu_custom_call.1} parent=1 // pred_region
      %69 = dma.done [#allocation6], 512
    $region29: #{tpu_custom_call.1} parent=1 // pred_fallthru
      _
    // Predicated region
    $region30: #{tpu_custom_call.1} parent=1 // pred_check
      _
    $region31: #{tpu_custom_call.1} parent=1 // pred_check_branch
      %71 = sbr.rel (0) target = $region33
    $region32: #{tpu_custom_call.1} parent=1 // pred_region
      %72 = dma.done [#allocation9], 512
    $region33: #{tpu_custom_call.1} parent=1 // pred_fallthru
      _
    %v73 = vld [vmem:[#allocation2] sm:$0xff]
    %v74 = vld [vmem:[#allocation2 + $0x8] sm:$0xff]
    %v75 = vld [vmem:[#allocation5] sm:$0xff]
    %v76 = vld [vmem:[#allocation5 + $0x8] sm:$0xff]
    %v77 = vld [vmem:[#allocation7] sm:$0xff]
    %v78 = vld [vmem:[#allocation7 + $0x8] sm:$0xff]
    %v79 = vld [vmem:[#allocation7 + $0x10] sm:$0xff]
    %v80 = vld [vmem:[#allocation7 + $0x18] sm:$0xff]
    %vm81 = vcmask 261120
    %v83 = vsel %vm81, %v75, 0
    %v86 = vsel %vm81, %v76, 0
    %v89 = vsel %vm81, %v77, 0
    %v92 = vsel %vm81, %v78, 0
    %v95 = vsel %vm81, %v79, 0
    %v98 = vsel %vm81, %v80, 0
    %100 = vmatprep.subr.mxu0 0.0
    %101 = vmatpush1.xpose.msra.mxu0 %v89
    %102 = vmatprep.subr.mxu0 0.0
    %103 = vmatpush1.xpose.msra.mxu0 %v92
    %104 = vmatprep.subr.mxu0 0.0
    %105 = vmatpush1.xpose.msra.mxu0 %v95
    %106 = vmatprep.subr.mxu0 0.0
    %107 = vmatpush1.xpose.msra.mxu0 %v98
    %108 = vmatprep.subr.mxu0 0.0
    %109 = vmatpush1.xpose.msra.mxu0 0.0
    %110 = vmatprep.subr.mxu0 0.0
    %111 = vmatpush1.xpose.msra.mxu0 0.0
    %112 = vmatprep.subr.mxu0 0.0
    %113 = vmatpush1.xpose.msra.mxu0 0.0
    %114 = vmatprep.subr.mxu0 0.0
    %115 = vmatpush1.xpose.msra.mxu0 0.0
    %116 = vmatprep.subr.mxu0 0.0
    %117 = vmatpush1.xpose.msra.mxu0 0.0
    %118 = vmatprep.subr.mxu0 0.0
    %119 = vmatpush1.xpose.msra.mxu0 0.0
    %120 = vmatprep.subr.mxu0 0.0
    %121 = vmatpush1.xpose.msra.mxu0 0.0
    %122 = vmatprep.subr.mxu0 0.0
    %123 = vmatpush1.xpose.msra.mxu0 0.0
    %124 = vmatprep.subr.mxu0 0.0
    %125 = vmatpush1.xpose.msra.mxu0 0.0
    %126 = vmatprep.subr.mxu0 0.0
    %127 = vmatpush1.xpose.msra.mxu0 0.0
    %128 = vmatprep.subr.mxu0 0.0
    %129 = vmatpush1.xpose.msra.mxu0 0.0
    %130 = vmatprep.subr.mxu0 0.0
    %131 = vmatpush1.xpose.msra.mxu0 0.0
    %132 = vmatprep.subr.mxu0 0.0
    %133 = vmatpush1.xpose.msra.mxu0 0.0
    %134 = vmatprep.subr.mxu0 0.0
    %135 = vmatpush1.xpose.msra.mxu0 0.0
    %136 = vmatprep.subr.mxu0 0.0
    %137 = vmatpush1.xpose.msra.mxu0 0.0
    %138 = vmatprep.subr.mxu0 0.0
    %139 = vmatpush1.xpose.msra.mxu0 0.0
    %140 = vmatprep.subr.mxu0 0.0
    %141 = vmatpush1.xpose.msra.mxu0 0.0
    %142 = vmatprep.subr.mxu0 0.0
    %143 = vmatpush1.xpose.msra.mxu0 0.0
    %144 = vmatprep.subr.mxu0 0.0
    %145 = vmatpush1.xpose.msra.mxu0 0.0
    %146 = vmatprep.subr.mxu0 0.0
    %147 = vmatpush1.xpose.msra.mxu0 0.0
    %148 = vmatprep.subr.mxu0 0.0
    %149 = vmatpush1.xpose.msra.mxu0 0.0
    %150 = vmatprep.subr.mxu0 0.0
    %151 = vmatpush1.xpose.msra.mxu0 0.0
    %152 = vmatprep.subr.mxu0 0.0
    %153 = vmatpush1.xpose.msra.mxu0 0.0
    %154 = vmatprep.subr.mxu0 0.0
    %155 = vmatpush1.xpose.msra.mxu0 0.0
    %156 = vmatprep.subr.mxu0 0.0
    %157 = vmatpush1.xpose.msra.mxu0 0.0
    %158 = vmatprep.subr.mxu0 0.0
    %159 = vmatpush1.xpose.msra.mxu0 0.0
    %160 = vmatprep.subr.mxu0 0.0
    %161 = vmatpush1.xpose.msra.mxu0 0.0
    %162 = vmatprep.subr.mxu0 0.0
    %163 = vmatpush1.xpose.msra.mxu0 0.0
    %164 = vmatprep.mubr.f32.mxu0 0.0
    %165 = vmatmul.mubr.f32.gmra.mrb[0].mxu0 %v83
    %v166 = vpop.f32.mrb[0].mxu0
    %v167 = vadd.f32 0.0, %v166
    %v168 = vpop.f32.mrb[0].mxu0
    %169 = vmatprep.mubr.f32.mxu0 0.0
    %170 = vmatmul.mubr.f32.gmra.mrb[0].mxu0 %v86
    %v171 = vpop.f32.mrb[0].mxu0
    %v172 = vadd.f32 0.0, %v171
    %v173 = vpop.f32.mrb[0].mxu0
    %174 = vdwg.mxu0
    %vm175 = vcmask 64512
    %v177 = vsel %vm175, %v73, 0
    %179 = vmatprep.subr.mxu0 0.0
    %180 = vmatpush1.msra.mxu0 %v167
    %181 = vmatprep.subr.mxu0 0.0
    %182 = vmatpush1.msra.mxu0 0.0
    %183 = vmatprep.subr.mxu0 0.0
    %184 = vmatpush1.msra.mxu0 0.0
    %185 = vmatprep.subr.mxu0 0.0
    %186 = vmatpush1.msra.mxu0 0.0
    %187 = vmatprep.subr.mxu0 0.0
    %188 = vmatpush1.msra.mxu0 0.0
    %189 = vmatprep.subr.mxu0 0.0
    %190 = vmatpush1.msra.mxu0 0.0
    %191 = vmatprep.subr.mxu0 0.0
    %192 = vmatpush1.msra.mxu0 0.0
    %193 = vmatprep.subr.mxu0 0.0
    %194 = vmatpush1.msra.mxu0 0.0
    %195 = vmatprep.subr.mxu0 0.0
    %196 = vmatpush1.msra.mxu0 0.0
    %197 = vmatprep.subr.mxu0 0.0
    %198 = vmatpush1.msra.mxu0 0.0
    %199 = vmatprep.subr.mxu0 0.0
    %200 = vmatpush1.msra.mxu0 0.0
    %201 = vmatprep.subr.mxu0 0.0
    %202 = vmatpush1.msra.mxu0 0.0
    %203 = vmatprep.subr.mxu0 0.0
    %204 = vmatpush1.msra.mxu0 0.0
    %205 = vmatprep.subr.mxu0 0.0
    %206 = vmatpush1.msra.mxu0 0.0
    %207 = vmatprep.subr.mxu0 0.0
    %208 = vmatpush1.msra.mxu0 0.0
    %209 = vmatprep.subr.mxu0 0.0
    %210 = vmatpush1.msra.mxu0 0.0
    %211 = vmatprep.subr.mxu0 0.0
    %212 = vmatpush1.msra.mxu0 0.0
    %213 = vmatprep.subr.mxu0 0.0
    %214 = vmatpush1.msra.mxu0 0.0
    %215 = vmatprep.subr.mxu0 0.0
    %216 = vmatpush1.msra.mxu0 0.0
    %217 = vmatprep.subr.mxu0 0.0
    %218 = vmatpush1.msra.mxu0 0.0
    %219 = vmatprep.subr.mxu0 0.0
    %220 = vmatpush1.msra.mxu0 0.0
    %221 = vmatprep.subr.mxu0 0.0
    %222 = vmatpush1.msra.mxu0 0.0
    %223 = vmatprep.subr.mxu0 0.0
    %224 = vmatpush1.msra.mxu0 0.0
    %225 = vmatprep.subr.mxu0 0.0
    %226 = vmatpush1.msra.mxu0 0.0
    %227 = vmatprep.subr.mxu0 0.0
    %228 = vmatpush1.msra.mxu0 0.0
    %229 = vmatprep.subr.mxu0 0.0
    %230 = vmatpush1.msra.mxu0 0.0
    %231 = vmatprep.subr.mxu0 0.0
    %232 = vmatpush1.msra.mxu0 0.0
    %233 = vmatprep.subr.mxu0 0.0
    %234 = vmatpush1.msra.mxu0 0.0
    %235 = vmatprep.subr.mxu0 0.0
    %236 = vmatpush1.msra.mxu0 0.0
    %237 = vmatprep.subr.mxu0 0.0
    %238 = vmatpush1.msra.mxu0 0.0
    %239 = vmatprep.subr.mxu0 0.0
    %240 = vmatpush1.msra.mxu0 0.0
    %241 = vmatprep.subr.mxu0 0.0
    %242 = vmatpush1.msra.mxu0 0.0
    %243 = vmatprep.mubr.f32.mxu0 0.0
    %244 = vmatmul.mubr.f32.gmra.mrb[0].mxu0 %v177
    %v245 = vpop.f32.mrb[0].mxu0
    %v246 = vadd.f32 0.0, %v245
    %v247 = vpop.f32.mrb[0].mxu0
    %248 = vdwg.mxu0
    %v250 = vsel %vm175, %v74, 0
    %252 = vmatprep.subr.mxu0 0.0
    %253 = vmatpush1.msra.mxu0 %v172
    %254 = vmatprep.subr.mxu0 0.0
    %255 = vmatpush1.msra.mxu0 0.0
    %256 = vmatprep.subr.mxu0 0.0
    %257 = vmatpush1.msra.mxu0 0.0
    %258 = vmatprep.subr.mxu0 0.0
    %259 = vmatpush1.msra.mxu0 0.0
    %260 = vmatprep.subr.mxu0 0.0
    %261 = vmatpush1.msra.mxu0 0.0
    %262 = vmatprep.subr.mxu0 0.0
    %263 = vmatpush1.msra.mxu0 0.0
    %264 = vmatprep.subr.mxu0 0.0
    %265 = vmatpush1.msra.mxu0 0.0
    %266 = vmatprep.subr.mxu0 0.0
    %267 = vmatpush1.msra.mxu0 0.0
    %268 = vmatprep.subr.mxu0 0.0
    %269 = vmatpush1.msra.mxu0 0.0
    %270 = vmatprep.subr.mxu0 0.0
    %271 = vmatpush1.msra.mxu0 0.0
    %272 = vmatprep.subr.mxu0 0.0
    %273 = vmatpush1.msra.mxu0 0.0
    %274 = vmatprep.subr.mxu0 0.0
    %275 = vmatpush1.msra.mxu0 0.0
    %276 = vmatprep.subr.mxu0 0.0
    %277 = vmatpush1.msra.mxu0 0.0
    %278 = vmatprep.subr.mxu0 0.0
    %279 = vmatpush1.msra.mxu0 0.0
    %280 = vmatprep.subr.mxu0 0.0
    %281 = vmatpush1.msra.mxu0 0.0
    %282 = vmatprep.subr.mxu0 0.0
    %283 = vmatpush1.msra.mxu0 0.0
    %284 = vmatprep.subr.mxu0 0.0
    %285 = vmatpush1.msra.mxu0 0.0
    %286 = vmatprep.subr.mxu0 0.0
    %287 = vmatpush1.msra.mxu0 0.0
    %288 = vmatprep.subr.mxu0 0.0
    %289 = vmatpush1.msra.mxu0 0.0
    %290 = vmatprep.subr.mxu0 0.0
    %291 = vmatpush1.msra.mxu0 0.0
    %292 = vmatprep.subr.mxu0 0.0
    %293 = vmatpush1.msra.mxu0 0.0
    %294 = vmatprep.subr.mxu0 0.0
    %295 = vmatpush1.msra.mxu0 0.0
    %296 = vmatprep.subr.mxu0 0.0
    %297 = vmatpush1.msra.mxu0 0.0
    %298 = vmatprep.subr.mxu0 0.0
    %299 = vmatpush1.msra.mxu0 0.0
    %300 = vmatprep.subr.mxu0 0.0
    %301 = vmatpush1.msra.mxu0 0.0
    %302 = vmatprep.subr.mxu0 0.0
    %303 = vmatpush1.msra.mxu0 0.0
    %304 = vmatprep.subr.mxu0 0.0
    %305 = vmatpush1.msra.mxu0 0.0
    %306 = vmatprep.subr.mxu0 0.0
    %307 = vmatpush1.msra.mxu0 0.0
    %308 = vmatprep.subr.mxu0 0.0
    %309 = vmatpush1.msra.mxu0 0.0
    %310 = vmatprep.subr.mxu0 0.0
    %311 = vmatpush1.msra.mxu0 0.0
    %312 = vmatprep.subr.mxu0 0.0
    %313 = vmatpush1.msra.mxu0 0.0
    %314 = vmatprep.subr.mxu0 0.0
    %315 = vmatpush1.msra.mxu0 0.0
    %316 = vmatprep.mubr.f32.mxu0 0.0
    %317 = vmatmul.mubr.f32.gmra.mrb[0].mxu0 %v250
    %v318 = vpop.f32.mrb[0].mxu0
    %v319 = vadd.f32 0.0, %v318
    %v320 = vpop.f32.mrb[0].mxu0
    %321 = vdwg.mxu0
    %v322 = vmul.f32 %v246, 0.1
    %v323 = vmul.f32 %v319, 0.1
    %v324 = vmax.f32 %v246, %v322
    %v325 = vmax.f32 %v319, %v323
    %v326 = vld [vmem:[#allocation8] sm:$0xff]
    %v327 = vld [vmem:[#allocation8 + $0x8] sm:$0xff]
    %v328 = vld [vmem:[#allocation8 + $0x10] sm:$0xff]
    %v329 = vld [vmem:[#allocation8 + $0x18] sm:$0xff]
    %v331 = vsel %vm81, %v324, 0
    %v334 = vsel %vm81, %v325, 0
    %v337 = vsel %vm81, %v326, 0
    %v340 = vsel %vm81, %v327, 0
    %v343 = vsel %vm81, %v328, 0
    %v346 = vsel %vm81, %v329, 0
    %348 = vmatprep.subr.mxu0 0.0
    %349 = vmatpush1.xpose.msra.mxu0 %v337
    %350 = vmatprep.subr.mxu0 0.0
    %351 = vmatpush1.xpose.msra.mxu0 %v340
    %352 = vmatprep.subr.mxu0 0.0
    %353 = vmatpush1.xpose.msra.mxu0 %v343
    %354 = vmatprep.subr.mxu0 0.0
    %355 = vmatpush1.xpose.msra.mxu0 %v346
    %356 = vmatprep.subr.mxu0 0.0
    %357 = vmatpush1.xpose.msra.mxu0 0.0
    %358 = vmatprep.subr.mxu0 0.0
    %359 = vmatpush1.xpose.msra.mxu0 0.0
    %360 = vmatprep.subr.mxu0 0.0
    %361 = vmatpush1.xpose.msra.mxu0 0.0
    %362 = vmatprep.subr.mxu0 0.0
    %363 = vmatpush1.xpose.msra.mxu0 0.0
    %364 = vmatprep.subr.mxu0 0.0
    %365 = vmatpush1.xpose.msra.mxu0 0.0
    %366 = vmatprep.subr.mxu0 0.0
    %367 = vmatpush1.xpose.msra.mxu0 0.0
    %368 = vmatprep.subr.mxu0 0.0
    %369 = vmatpush1.xpose.msra.mxu0 0.0
    %370 = vmatprep.subr.mxu0 0.0
    %371 = vmatpush1.xpose.msra.mxu0 0.0
    %372 = vmatprep.subr.mxu0 0.0
    %373 = vmatpush1.xpose.msra.mxu0 0.0
    %374 = vmatprep.subr.mxu0 0.0
    %375 = vmatpush1.xpose.msra.mxu0 0.0
    %376 = vmatprep.subr.mxu0 0.0
    %377 = vmatpush1.xpose.msra.mxu0 0.0
    %378 = vmatprep.subr.mxu0 0.0
    %379 = vmatpush1.xpose.msra.mxu0 0.0
    %380 = vmatprep.subr.mxu0 0.0
    %381 = vmatpush1.xpose.msra.mxu0 0.0
    %382 = vmatprep.subr.mxu0 0.0
    %383 = vmatpush1.xpose.msra.mxu0 0.0
    %384 = vmatprep.subr.mxu0 0.0
    %385 = vmatpush1.xpose.msra.mxu0 0.0
    %386 = vmatprep.subr.mxu0 0.0
    %387 = vmatpush1.xpose.msra.mxu0 0.0
    %388 = vmatprep.subr.mxu0 0.0
    %389 = vmatpush1.xpose.msra.mxu0 0.0
    %390 = vmatprep.subr.mxu0 0.0
    %391 = vmatpush1.xpose.msra.mxu0 0.0
    %392 = vmatprep.subr.mxu0 0.0
    %393 = vmatpush1.xpose.msra.mxu0 0.0
    %394 = vmatprep.subr.mxu0 0.0
    %395 = vmatpush1.xpose.msra.mxu0 0.0
    %396 = vmatprep.subr.mxu0 0.0
    %397 = vmatpush1.xpose.msra.mxu0 0.0
    %398 = vmatprep.subr.mxu0 0.0
    %399 = vmatpush1.xpose.msra.mxu0 0.0
    %400 = vmatprep.subr.mxu0 0.0
    %401 = vmatpush1.xpose.msra.mxu0 0.0
    %402 = vmatprep.subr.mxu0 0.0
    %403 = vmatpush1.xpose.msra.mxu0 0.0
    %404 = vmatprep.subr.mxu0 0.0
    %405 = vmatpush1.xpose.msra.mxu0 0.0
    %406 = vmatprep.subr.mxu0 0.0
    %407 = vmatpush1.xpose.msra.mxu0 0.0
    %408 = vmatprep.subr.mxu0 0.0
    %409 = vmatpush1.xpose.msra.mxu0 0.0
    %410 = vmatprep.subr.mxu0 0.0
    %411 = vmatpush1.xpose.msra.mxu0 0.0
    %412 = vmatprep.mubr.f32.mxu0 0.0
    %413 = vmatmul.mubr.f32.gmra.mrb[0].mxu0 %v331
    %v414 = vpop.f32.mrb[0].mxu0
    %v415 = vadd.f32 0.0, %v414
    %v416 = vpop.f32.mrb[0].mxu0
    %417 = vmatprep.mubr.f32.mxu0 0.0
    %418 = vmatmul.mubr.f32.gmra.mrb[0].mxu0 %v334
    %v419 = vpop.f32.mrb[0].mxu0
    %v420 = vadd.f32 0.0, %v419
    %v421 = vpop.f32.mrb[0].mxu0
    %422 = vdwg.mxu0
    %423 = vmatprep.subr.mxu0 0.0
    %424 = vmatpush1.msra.mxu0 %v415
    %425 = vmatprep.subr.mxu0 0.0
    %426 = vmatpush1.msra.mxu0 0.0
    %427 = vmatprep.subr.mxu0 0.0
    %428 = vmatpush1.msra.mxu0 0.0
    %429 = vmatprep.subr.mxu0 0.0
    %430 = vmatpush1.msra.mxu0 0.0
    %431 = vmatprep.subr.mxu0 0.0
    %432 = vmatpush1.msra.mxu0 0.0
    %433 = vmatprep.subr.mxu0 0.0
    %434 = vmatpush1.msra.mxu0 0.0
    %435 = vmatprep.subr.mxu0 0.0
    %436 = vmatpush1.msra.mxu0 0.0
    %437 = vmatprep.subr.mxu0 0.0
    %438 = vmatpush1.msra.mxu0 0.0
    %439 = vmatprep.subr.mxu0 0.0
    %440 = vmatpush1.msra.mxu0 0.0
    %441 = vmatprep.subr.mxu0 0.0
    %442 = vmatpush1.msra.mxu0 0.0
    %443 = vmatprep.subr.mxu0 0.0
    %444 = vmatpush1.msra.mxu0 0.0
    %445 = vmatprep.subr.mxu0 0.0
    %446 = vmatpush1.msra.mxu0 0.0
    %447 = vmatprep.subr.mxu0 0.0
    %448 = vmatpush1.msra.mxu0 0.0
    %449 = vmatprep.subr.mxu0 0.0
    %450 = vmatpush1.msra.mxu0 0.0
    %451 = vmatprep.subr.mxu0 0.0
    %452 = vmatpush1.msra.mxu0 0.0
    %453 = vmatprep.subr.mxu0 0.0
    %454 = vmatpush1.msra.mxu0 0.0
    %455 = vmatprep.subr.mxu0 0.0
    %456 = vmatpush1.msra.mxu0 0.0
    %457 = vmatprep.subr.mxu0 0.0
    %458 = vmatpush1.msra.mxu0 0.0
    %459 = vmatprep.subr.mxu0 0.0
    %460 = vmatpush1.msra.mxu0 0.0
    %461 = vmatprep.subr.mxu0 0.0
    %462 = vmatpush1.msra.mxu0 0.0
    %463 = vmatprep.subr.mxu0 0.0
    %464 = vmatpush1.msra.mxu0 0.0
    %465 = vmatprep.subr.mxu0 0.0
    %466 = vmatpush1.msra.mxu0 0.0
    %467 = vmatprep.subr.mxu0 0.0
    %468 = vmatpush1.msra.mxu0 0.0
    %469 = vmatprep.subr.mxu0 0.0
    %470 = vmatpush1.msra.mxu0 0.0
    %471 = vmatprep.subr.mxu0 0.0
    %472 = vmatpush1.msra.mxu0 0.0
    %473 = vmatprep.subr.mxu0 0.0
    %474 = vmatpush1.msra.mxu0 0.0
    %475 = vmatprep.subr.mxu0 0.0
    %476 = vmatpush1.msra.mxu0 0.0
    %477 = vmatprep.subr.mxu0 0.0
    %478 = vmatpush1.msra.mxu0 0.0
    %479 = vmatprep.subr.mxu0 0.0
    %480 = vmatpush1.msra.mxu0 0.0
    %481 = vmatprep.subr.mxu0 0.0
    %482 = vmatpush1.msra.mxu0 0.0
    %483 = vmatprep.subr.mxu0 0.0
    %484 = vmatpush1.msra.mxu0 0.0
    %485 = vmatprep.subr.mxu0 0.0
    %486 = vmatpush1.msra.mxu0 0.0
    %487 = vmatprep.mubr.f32.mxu0 0.0
    %488 = vmatmul.mubr.f32.gmra.mrb[0].mxu0 %v177
    %v489 = vpop.f32.mrb[0].mxu0
    %v490 = vadd.f32 0.0, %v489
    %v491 = vpop.f32.mrb[0].mxu0
    %492 = vdwg.mxu0
    %493 = vmatprep.subr.mxu0 0.0
    %494 = vmatpush1.msra.mxu0 %v420
    %495 = vmatprep.subr.mxu0 0.0
    %496 = vmatpush1.msra.mxu0 0.0
    %497 = vmatprep.subr.mxu0 0.0
    %498 = vmatpush1.msra.mxu0 0.0
    %499 = vmatprep.subr.mxu0 0.0
    %500 = vmatpush1.msra.mxu0 0.0
    %501 = vmatprep.subr.mxu0 0.0
    %502 = vmatpush1.msra.mxu0 0.0
    %503 = vmatprep.subr.mxu0 0.0
    %504 = vmatpush1.msra.mxu0 0.0
    %505 = vmatprep.subr.mxu0 0.0
    %506 = vmatpush1.msra.mxu0 0.0
    %507 = vmatprep.subr.mxu0 0.0
    %508 = vmatpush1.msra.mxu0 0.0
    %509 = vmatprep.subr.mxu0 0.0
    %510 = vmatpush1.msra.mxu0 0.0
    %511 = vmatprep.subr.mxu0 0.0
    %512 = vmatpush1.msra.mxu0 0.0
    %513 = vmatprep.subr.mxu0 0.0
    %514 = vmatpush1.msra.mxu0 0.0
    %515 = vmatprep.subr.mxu0 0.0
    %516 = vmatpush1.msra.mxu0 0.0
    %517 = vmatprep.subr.mxu0 0.0
    %518 = vmatpush1.msra.mxu0 0.0
    %519 = vmatprep.subr.mxu0 0.0
    %520 = vmatpush1.msra.mxu0 0.0
    %521 = vmatprep.subr.mxu0 0.0
    %522 = vmatpush1.msra.mxu0 0.0
    %523 = vmatprep.subr.mxu0 0.0
    %524 = vmatpush1.msra.mxu0 0.0
    %525 = vmatprep.subr.mxu0 0.0
    %526 = vmatpush1.msra.mxu0 0.0
    %527 = vmatprep.subr.mxu0 0.0
    %528 = vmatpush1.msra.mxu0 0.0
    %529 = vmatprep.subr.mxu0 0.0
    %530 = vmatpush1.msra.mxu0 0.0
    %531 = vmatprep.subr.mxu0 0.0
    %532 = vmatpush1.msra.mxu0 0.0
    %533 = vmatprep.subr.mxu0 0.0
    %534 = vmatpush1.msra.mxu0 0.0
    %535 = vmatprep.subr.mxu0 0.0
    %536 = vmatpush1.msra.mxu0 0.0
    %537 = vmatprep.subr.mxu0 0.0
    %538 = vmatpush1.msra.mxu0 0.0
    %539 = vmatprep.subr.mxu0 0.0
    %540 = vmatpush1.msra.mxu0 0.0
    %541 = vmatprep.subr.mxu0 0.0
    %542 = vmatpush1.msra.mxu0 0.0
    %543 = vmatprep.subr.mxu0 0.0
    %544 = vmatpush1.msra.mxu0 0.0
    %545 = vmatprep.subr.mxu0 0.0
    %546 = vmatpush1.msra.mxu0 0.0
    %547 = vmatprep.subr.mxu0 0.0
    %548 = vmatpush1.msra.mxu0 0.0
    %549 = vmatprep.subr.mxu0 0.0
    %550 = vmatpush1.msra.mxu0 0.0
    %551 = vmatprep.subr.mxu0 0.0
    %552 = vmatpush1.msra.mxu0 0.0
    %553 = vmatprep.subr.mxu0 0.0
    %554 = vmatpush1.msra.mxu0 0.0
    %555 = vmatprep.subr.mxu0 0.0
    %556 = vmatpush1.msra.mxu0 0.0
    %557 = vmatprep.mubr.f32.mxu0 0.0
    %558 = vmatmul.mubr.f32.gmra.mrb[0].mxu0 %v250
    %v559 = vpop.f32.mrb[0].mxu0
    %v560 = vadd.f32 0.0, %v559
    %v561 = vpop.f32.mrb[0].mxu0
    %562 = vdwg.mxu0
    %v563 = vmul.f32 %v490, 0.1
    %v564 = vmul.f32 %v560, 0.1
    %v565 = vmax.f32 %v490, %v563
    %v566 = vmax.f32 %v560, %v564
    %567 = vst.msk [vmem:[#allocation10] sm:$0xff] %vm81, %v565
    %568 = vst.msk [vmem:[#allocation10 + $0x8] sm:$0xff] %vm81, %v566
    // Predicated region
    $region34: #{tpu_custom_call.1} parent=1 // pred_check
      _
    $region35: #{tpu_custom_call.1} parent=1 // pred_check_branch
      %570 = sbr.rel (0) target = $region37
    $region36: #{tpu_custom_call.1} parent=1 // pred_region
      %s572 = ssub.s32 256, 256
      %573 = vsyncadd [#allocation4], %s572
      %s574 = sshll.u32 [#allocation10], 4
      %s575 = int_to_ptr.vmem [resolvable:$true] %s574
      %580 = dma.vmem_to_hbm [thread:$0]  %s575, 256, %s4, [#allocation4], 128, 128, 8
    $region37: #{tpu_custom_call.1} parent=1 // pred_fallthru
      _
    // Predicated region
    $region38: #{tpu_custom_call.1} parent=1 // pred_check
      _
    $region39: #{tpu_custom_call.1} parent=1 // pred_check_branch
      %582 = sbr.rel (0) target = $region41
    $region40: #{tpu_custom_call.1} parent=1 // pred_region
      %583 = dma.done [#allocation4], 256
    $region41: #{tpu_custom_call.1} parent=1 // pred_fallthru
      _
    %584 = vsyncpa [#allocation3], 1
    %585 = vsyncpa [#allocation6], 1
    %586 = vsyncpa [#allocation9], 1
    %587 = vsyncpa [#allocation4], 1

</llo_original>
